<compile_context>
chip_gen: v7x
topology: tpu7x:2x2x1
jax: 0.10.0
libtpu: 0.0.40
codegen_flags: <defaults>
</compile_context>

<pallas_src>
import jax
import jax.numpy as jnp
from jax.experimental import pallas as pl
from jax.experimental.pallas import tpu as pltpu

EPS = 1e-6


def _cdiv(a: int, b: int) -> int:
    return -(-a // b)


def _round_up(v: int, m: int) -> int:
    return _cdiv(v, m) * m


def _make_norm_kernel(d_actual: int):
    """LayerNorm kernel for a fixed (true) feature size.

    Only plain Python floats are closed over, so nothing is captured as a
    jaxpr constant (the previous version failed to trace because of np/jnp
    scalar closures).
    """
    inv_d = 1.0 / float(d_actual)
    inv_dm1 = 1.0 / float(max(d_actual - 1, 1))  # guard degenerate D=1

    def kernel(alpha_ref, bias_ref, x_ref, o_ref):
        # x_ref: (tile_rows, D) tile in VMEM; alpha/bias: (1,) f32 in SMEM.
        x = x_ref[...].astype(jnp.float32)

        # Two-pass moments: tile is VMEM resident, both passes hide under DMA.
        mean = jnp.sum(x, axis=-1, keepdims=True) * inv_d
        xc = x - mean
        var = jnp.sum(xc * xc, axis=-1, keepdims=True) * inv_dm1  # unbiased
        std = jnp.sqrt(var)

        # Fold alpha into a per-row scale.  Exact division (torch parity);
        # this kernel is HBM-bound so the divide is free anyway.
        scale = alpha_ref[0] / (std + EPS)
        o_ref[...] = (xc * scale + bias_ref[0]).astype(o_ref.dtype)

    return kernel


def _tpu_hints():
    """Best-effort (num_tensorcores, scoped vmem limit) for the local chip."""
    num_cores = 1
    vmem_limit = 32 * 1024 * 1024  # conservative default, valid on all gens
    try:
        kind = jax.devices()[0].device_kind.lower()
    except Exception:  # pragma: no cover - defensive
        return num_cores, vmem_limit
    if "v7" in kind:
        num_cores = 2                       # 2 TCs share the "parallel" grid axis
        vmem_limit = 32 * 1024 * 1024       # 64 MiB physical per TC -> stay scoped
    elif "v5p" in kind or "v4" in kind:
        num_cores = 2                       # megacore
        vmem_limit = 64 * 1024 * 1024
    elif "v5" in kind or "v6" in kind:      # v5e / v6e: single TC, 128 MiB VMEM
        vmem_limit = 64 * 1024 * 1024
    return num_cores, vmem_limit


def _choose_tile_rows(rows: int, d: int, itemsize: int, *,
                      num_cores: int, budget_bytes: int,
                      max_tile: int = 8192) -> int:
    """Largest multiple-of-8 row tile fitting the VMEM budget.

    Working-set estimate per row element: double-buffered input + output at
    the I/O dtype (4*itemsize) plus ~12 B of f32 temps (x_f32, centered copy,
    squared-reduce temp).
    """
    per_row = d * (4 * itemsize + 12)
    tile = max(8, min(max_tile, budget_bytes // max(per_row, 1)))
    tile = max(8, (tile // 8) * 8)

    # Never larger than the (8-rounded) row count.
    tile = min(tile, _round_up(rows, 8))

    # Balance the trailing ragged tile (rows=1100, tile=1024 -> tile=552 etc.).
    n_steps = _cdiv(rows, tile)
    tile = min(tile, _round_up(_cdiv(rows, n_steps), 8))
    tile = max(8, tile)

    # Megacore chips: keep >= 2 steps per core so each core double-buffers.
    # Single-TC chips (v5e/v6e) keep the big tile -- shrinking only adds
    # per-step overhead there.
    if num_cores > 1:
        target_steps = 2 * num_cores
        while tile > 8 and _cdiv(rows, tile) < target_steps:
            tile = max(8, ((tile // 2) // 8) * 8)
    return int(tile)


def encoder_forward(x, mask, alpha, bias):
    """Encoder forward with an empty layer stack: LayerNormalization(x).

    x:     (..., D) float32 or bfloat16
    mask:  unused (consumed only by the empty layer list)
    alpha: (1,) float32 scalar parameter
    bias:  (1,) float32 scalar parameter
    """
    del mask  # no layers -> mask is never used

    orig_shape = x.shape
    D = int(orig_shape[-1])
    rows = 1
    for s in orig_shape[:-1]:
        rows *= int(s)
    x2 = x.reshape(rows, D)

    num_cores, vmem_limit = _tpu_hints()
    itemsize = jnp.dtype(x.dtype).itemsize
    budget = (vmem_limit * 3) // 4  # leave headroom for Mosaic's own scratch
    tile_rows = _choose_tile_rows(rows, D, itemsize,
                                  num_cores=num_cores, budget_bytes=budget)
    num_tiles = _cdiv(rows, tile_rows)

    out = pl.pallas_call(
        _make_norm_kernel(D),
        out_shape=jax.ShapeDtypeStruct((rows, D), x.dtype),
        grid_spec=pltpu.PrefetchScalarGridSpec(
            num_scalar_prefetch=0,
            grid=(num_tiles,),
            in_specs=[
                pl.BlockSpec(memory_space=pltpu.MemorySpace.SMEM),   # alpha
                pl.BlockSpec(memory_space=pltpu.MemorySpace.SMEM),   # bias
                pl.BlockSpec((tile_rows, D), lambda i: (i, 0)),       # x
            ],
            out_specs=pl.BlockSpec((tile_rows, D), lambda i: (i, 0)),
        ),
        compiler_params=pltpu.CompilerParams(
            dimension_semantics=("parallel",),
            vmem_limit_bytes=vmem_limit,
        ),
    )(alpha.astype(jnp.float32), bias.astype(jnp.float32), x2)

    return out.reshape(orig_shape)


def _reference(x, alpha, bias):
    x = x.astype(jnp.float32)
    d = x.shape[-1]
    mean = jnp.mean(x, axis=-1, keepdims=True)
    var = jnp.sum((x - mean) ** 2, axis=-1, keepdims=True) / max(d - 1, 1)
    std = jnp.sqrt(var)
    return alpha[0] * (x - mean) / (std + EPS) + bias[0]


if __name__ == "__main__":
    key = jax.random.PRNGKey(0)

    # Parameters match nn.Parameter(torch.ones(1)) / nn.Parameter(torch.zeros(1)).
    alpha = jnp.ones((1,), dtype=jnp.float32)
    bias = jnp.zeros((1,), dtype=jnp.float32)

    # Case 1: lane-aligned transformer-ish shape.
    B, S, D = 2, 8, 128
    x = jax.random.normal(key, (B, S, D), dtype=jnp.float32)
    mask = jnp.ones((B, 1, S, S), dtype=jnp.float32)  # unused by empty stack

    out = jax.block_until_ready(encoder_forward(x, mask, alpha, bias))
    ref = _reference(x, alpha, bias)
    assert out.shape == (B, S, D)
    assert jnp.allclose(out, ref, atol=1e-3, rtol=1e-3), "mismatch (aligned case)"

    # Case 2: ragged rows + non-multiple-of-128 features (no pad/slice path).
    B2, S2, D2 = 2, 7, 96
    x2 = jax.random.normal(jax.random.PRNGKey(1), (B2, S2, D2), dtype=jnp.float32)
    out2 = jax.block_until_ready(encoder_forward(x2, None, alpha, bias))
    ref2 = _reference(x2, alpha, bias)
    assert out2.shape == (B2, S2, D2)
    assert jnp.allclose(out2, ref2, atol=1e-3, rtol=1e-3), "mismatch (ragged case)"

    print("KERNEL_OK")
</pallas_src>

<mosaic_0001>
module attributes {stable_mosaic.version = 11 : i64} {
  func.func @kernel(%arg0: i32, %arg1: memref<1xf32, #tpu.memory_space<smem>>, %arg2: memref<1xf32, #tpu.memory_space<smem>>, %arg3: memref<16x128xf32, #tpu.memory_space<vmem>>, %arg4: memref<16x128xf32, #tpu.memory_space<vmem>>) attributes {dimension_semantics = [#tpu.dimension_semantics<parallel>], iteration_bounds = array<i64: 1>, scalar_prefetch = 0 : i64, scratch_operands = 0 : i64, tpu.core_type = #tpu.core_type<tc>, window_params = [{transform_indices = @transform_0, window_bounds = array<i64: 1>}, {transform_indices = @transform_1, window_bounds = array<i64: 1>}, {transform_indices = @transform_2, window_bounds = array<i64: 16, 128>}, {transform_indices = @transform_3, window_bounds = array<i64: 16, 128>}]} {
    %c0 = arith.constant 0 : index
    %c0_0 = arith.constant 0 : index
    %0 = vector.load %arg3[%c0, %c0_0] : memref<16x128xf32, #tpu.memory_space<vmem>>, vector<16x128xf32>
    %cst = arith.constant dense<0.000000e+00> : vector<16xf32>
    %1 = vector.multi_reduction <add>, %0, %cst [1] : vector<16x128xf32> to vector<16xf32>
    %2 = vector.shape_cast %1 : vector<16xf32> to vector<16x1xf32>
    %cst_1 = arith.constant 7.812500e-03 : f32
    %3 = vector.broadcast %cst_1 : f32 to vector<16x1xf32>
    %4 = arith.mulf %2, %3 : vector<16x1xf32>
    %5 = vector.broadcast %4 : vector<16x1xf32> to vector<16x128xf32>
    %6 = arith.subf %0, %5 : vector<16x128xf32>
    %7 = arith.mulf %6, %6 : vector<16x128xf32>
    %cst_2 = arith.constant dense<0.000000e+00> : vector<16xf32>
    %8 = vector.multi_reduction <add>, %7, %cst_2 [1] : vector<16x128xf32> to vector<16xf32>
    %9 = vector.shape_cast %8 : vector<16xf32> to vector<16x1xf32>
    %cst_3 = arith.constant 0.00787401571 : f32
    %10 = vector.broadcast %cst_3 : f32 to vector<16x1xf32>
    %11 = arith.mulf %9, %10 : vector<16x1xf32>
    %12 = math.sqrt %11 : vector<16x1xf32>
    %c0_4 = arith.constant 0 : index
    %13 = memref.load %arg1[%c0_4] : memref<1xf32, #tpu.memory_space<smem>>
    %cst_5 = arith.constant 9.99999997E-7 : f32
    %14 = vector.broadcast %cst_5 : f32 to vector<16x1xf32>
    %15 = arith.addf %12, %14 : vector<16x1xf32>
    %16 = vector.broadcast %13 : f32 to vector<16x1xf32>
    %17 = arith.divf %16, %15 : vector<16x1xf32>
    %18 = vector.broadcast %17 : vector<16x1xf32> to vector<16x128xf32>
    %19 = arith.mulf %6, %18 : vector<16x128xf32>
    %c0_6 = arith.constant 0 : index
    %20 = memref.load %arg2[%c0_6] : memref<1xf32, #tpu.memory_space<smem>>
    %21 = vector.broadcast %20 : f32 to vector<16x128xf32>
    %22 = arith.addf %19, %21 : vector<16x128xf32>
    %c0_7 = arith.constant 0 : index
    %c0_8 = arith.constant 0 : index
    %23 = vector.load %arg4[%c0_7, %c0_8] : memref<16x128xf32, #tpu.memory_space<vmem>>, vector<16x128xf32>
    tpu.vector_store %arg4[%c0_7, %c0_8], %22 {strides = array<i32>} : memref<16x128xf32, #tpu.memory_space<vmem>>, vector<16x128xf32>,
    return
  }
  func.func @transform_0(%arg0: i32) -> i32 {
    %c0_i32 = arith.constant 0 : i32
    %c0_i32_0 = arith.constant 0 : i32
    return %c0_i32 : i32
  }
  func.func @transform_1(%arg0: i32) -> i32 {
    %c0_i32 = arith.constant 0 : i32
    %c0_i32_0 = arith.constant 0 : i32
    return %c0_i32 : i32
  }
  func.func @transform_2(%arg0: i32) -> (i32, i32) {
    %c0_i32 = arith.constant 0 : i32
    %c0_i32_0 = arith.constant 0 : i32
    return %arg0, %c0_i32 : i32, i32
  }
  func.func @transform_3(%arg0: i32) -> (i32, i32) {
    %c0_i32 = arith.constant 0 : i32
    %c0_i32_0 = arith.constant 0 : i32
    return %arg0, %c0_i32 : i32, i32
  }
}

</mosaic_0001>

<llo_original>
// kernel: tpu_custom_call.1
$region0: #{tpu_custom_call.1}
  #allocation0 [shape = 'u32[]', space=smem, size = 0x4, offset = 0x4, fixed_abs, tag = 'smem constant byte address 0x4 - core index']
  #allocation1 [shape = 'u32[144,128]{1,0:T(1,128)}', space=vmem, size = 0x12000, scoped, tag = 'internal scratch']
  #allocation2 [shape = 'f32[1]{0:T(128)S(6)}', space=smem, size = 0x200, scoped, tag = 'scoped memory for tpu_custom_call.1']
  #allocation3 [shape = 'f32[1]{0:T(128)S(6)}', space=smem, size = 0x200, scoped, tag = 'scoped memory for tpu_custom_call.1']
  %s0 = inlined_call_operand.<no memory space> [shape: f32[1], index: 0, kind: input, shape index: {}]
  %s1 = inlined_call_operand.<no memory space> [shape: f32[1], index: 1, kind: input, shape index: {}]
  %s2 = inlined_call_operand.hbm [shape: f32[16,128], index: 2, kind: input, shape index: {}]
  %s3 = inlined_call_operand.hbm [shape: f32[16,128], index: 3, kind: output, shape index: {}]
  %s4 = sld [smem:[#allocation0]]
  $region26: #{tpu_custom_call.1} parent=0
    _
  %s6 = ssub.s32 1, %s4
  %s7 = scalar_select 0, %s6, %s4
  %8 = sst [smem:[#allocation2]] %s0
  %9 = sst [smem:[#allocation3]] %s1
  $region1: #{tpu_custom_call.1} parent=0
    #allocation4 [shape = 'u8[8192]{0}', space=vmem, size = 0x2000, scoped, tag = 'input window, operand 2, single buffered']
    #allocation5 [shape = 's32[1]{0}', space=sflag, size = 0x4, scoped, tag = 'scoped memory for tpu_custom_call.1']
    #allocation6 [shape = 's32[1]{0}', space=sflag, size = 0x4, scoped, tag = 'scoped memory for tpu_custom_call.1']
    #allocation7 [shape = 'u8[8192]{0}', space=vmem, size = 0x2000, scoped, tag = 'output window, operand 0, single buffered']
    %10 = vsyncpa [#allocation5], 0
    %11 = vsyncpa [#allocation6], 0
    // Predicated region
    $region2: #{tpu_custom_call.1} parent=1 // pred_check
      _
    $region3: #{tpu_custom_call.1} parent=1 // pred_check_branch
      %13 = sbr.rel (0) target = $region5
    $region4: #{tpu_custom_call.1} parent=1 // pred_region
      _
    $region5: #{tpu_custom_call.1} parent=1 // pred_fallthru
      _
    // Predicated region
    $region6: #{tpu_custom_call.1} parent=1 // pred_check
      _
    $region7: #{tpu_custom_call.1} parent=1 // pred_check_branch
      %15 = sbr.rel (0) target = $region9
    $region8: #{tpu_custom_call.1} parent=1 // pred_region
      _
    $region9: #{tpu_custom_call.1} parent=1 // pred_fallthru
      _
    // Predicated region
    $region10: #{tpu_custom_call.1} parent=1 // pred_check
      _
    $region11: #{tpu_custom_call.1} parent=1 // pred_check_branch
      %17 = sbr.rel (0) target = $region13
    $region12: #{tpu_custom_call.1} parent=1 // pred_region
      %s19 = ssub.s32 256, 256
      %20 = vsyncadd [#allocation5], %s19
      %s21 = sshll.u32 [#allocation4], 4
      %s22 = int_to_ptr.vmem [resolvable:$true] %s21
      %27 = dma.hbm_to_vmem [thread:$0]  %s2, 256, %s22, [#allocation5], 128, 128, 8
    $region13: #{tpu_custom_call.1} parent=1 // pred_fallthru
      _
    // Predicated region
    $region14: #{tpu_custom_call.1} parent=1 // pred_check
      _
    $region15: #{tpu_custom_call.1} parent=1 // pred_check_branch
      %29 = sbr.rel (0) target = $region17
    $region16: #{tpu_custom_call.1} parent=1 // pred_region
      %30 = dma.done [#allocation5], 256
    $region17: #{tpu_custom_call.1} parent=1 // pred_fallthru
      _
    %v31 = vld [vmem:[#allocation4] sm:$0xff]
    %v32 = vld [vmem:[#allocation4 + $0x8] sm:$0xff]
    %33 = vadd.xlane.f32.xlu0 %v31
    %v34 = vpop.xlane.xlu0 %33
    %35 = vadd.xlane.f32.xlu0 %v32
    %v36 = vpop.xlane.xlu0 %35
    %v37 = vmul.f32 %v34, 0.0078125
    %v38 = vmul.f32 %v36, 0.0078125
    %v39 = vsub.f32 %v31, %v37
    %v40 = vsub.f32 %v32, %v38
    %v41 = vmul.f32 %v39, %v39
    %v42 = vmul.f32 %v40, %v40
    %43 = vadd.xlane.f32.xlu0 %v41
    %v44 = vpop.xlane.xlu0 %43
    %45 = vadd.xlane.f32.xlu0 %v42
    %v46 = vpop.xlane.xlu0 %45
    %v47 = vmul.f32 %v44, 0.007874016
    %v48 = vmul.f32 %v46, 0.007874016
    %v49 = vrsqrt.pop %v47
    %v50 = vmul.f32 %v47, %v49
    %vm51 = vcmp.eq.f32.partialorder %v47, inf
    %v52 = vsel %vm51, %v47, %v50
    %vm53 = vcmp.eq.f32.partialorder %v47, 0.0
    %v54 = vand.u32 %v47, 2147483648
    %v55 = vsel %vm53, %v54, %v52
    %v56 = vrsqrt.pop %v48
    %v57 = vmul.f32 %v48, %v56
    %vm58 = vcmp.eq.f32.partialorder %v48, inf
    %v59 = vsel %vm58, %v48, %v57
    %vm60 = vcmp.eq.f32.partialorder %v48, 0.0
    %v61 = vand.u32 %v48, 2147483648
    %v62 = vsel %vm60, %v61, %v59
    %s63 = sld [smem:[#allocation2]]
    %v64 = vadd.f32 %v55, 1e-06
    %v65 = vadd.f32 %v62, 1e-06
    %v66 = vstv %s63
    %v67 = vrcp.pop %v64
    %v68 = vmul.f32 %v66, %v67
    %v69 = vrcp.pop %v65
    %v70 = vmul.f32 %v66, %v69
    %v71 = vmul.f32 %v39, %v68
    %v72 = vmul.f32 %v40, %v70
    %s73 = sld [smem:[#allocation3]]
    %v74 = vstv %s73
    %v75 = vadd.f32 %v71, %v74
    %v76 = vadd.f32 %v72, %v74
    %77 = vst [vmem:[#allocation7] sm:$0xff] %v75
    %78 = vst [vmem:[#allocation7 + $0x8] sm:$0xff] %v76
    // Predicated region
    $region18: #{tpu_custom_call.1} parent=1 // pred_check
      _
    $region19: #{tpu_custom_call.1} parent=1 // pred_check_branch
      %80 = sbr.rel (0) target = $region21
    $region20: #{tpu_custom_call.1} parent=1 // pred_region
      %s82 = ssub.s32 256, 256
      %83 = vsyncadd [#allocation6], %s82
      %s84 = sshll.u32 [#allocation7], 4
      %s85 = int_to_ptr.vmem [resolvable:$true] %s84
      %90 = dma.vmem_to_hbm [thread:$0]  %s85, 256, %s3, [#allocation6], 128, 128, 8
    $region21: #{tpu_custom_call.1} parent=1 // pred_fallthru
      _
    // Predicated region
    $region22: #{tpu_custom_call.1} parent=1 // pred_check
      _
    $region23: #{tpu_custom_call.1} parent=1 // pred_check_branch
      %92 = sbr.rel (0) target = $region25
    $region24: #{tpu_custom_call.1} parent=1 // pred_region
      %93 = dma.done [#allocation6], 256
    $region25: #{tpu_custom_call.1} parent=1 // pred_fallthru
      _
    %94 = vsyncpa [#allocation5], 1
    %95 = vsyncpa [#allocation6], 1

</llo_original>
